<compile_context>
chip_gen: v6e
topology: v6e:2x2x1
jax: 0.10.0
libtpu: 0.0.40
codegen_flags: <defaults>
</compile_context>

<pallas_src>
import jax
import jax.numpy as jnp
from jax.experimental import pallas as pl
from jax.experimental.pallas import tpu as pltpu

INPUT_DIM = 128
HIDDEN_DIM = 256
OUTPUT_DIM = 700
LN_EPS = 1e-5
TB_MAX = 512  # max rows per grid step (peak VMEM ~5 MB, far under limits)


def _round_up(n: int, m: int) -> int:
    return ((n + m - 1) // m) * m


def _pick_row_tile(batch: int) -> int:
    """Row tile: multiple of 8 (f32 sublane), capped at TB_MAX.

    Targets >= 2 grid steps whenever the batch allows it so the 'parallel'
    batch axis actually spans both TensorCores on v7x (grid=(1,) would idle
    one TC); on v5e/v6e the extra step is negligible (~0.35 us)."""
    half = _round_up(max(-(-batch // 2), 1), 8)  # cdiv(batch, 2), 8-aligned
    return min(TB_MAX, half)


def policy_head_kernel(x_ref, w1_ref, b1_ref, w2_ref, b2_ref, o_ref):
    # --- LayerNorm (affine already folded into w1/b1 by the wrapper) ---
    x = x_ref[...].astype(jnp.float32)                          # (TB, 128)
    mean = jnp.mean(x, axis=-1, keepdims=True)
    centered = x - mean
    var = jnp.mean(centered * centered, axis=-1, keepdims=True)
    x_norm = centered * jax.lax.rsqrt(var + LN_EPS)             # (TB, 128)

    # --- Linear 128 -> 256 + ReLU (MXU, f32 accumulate) ---
    h = jnp.dot(x_norm, w1_ref[...], preferred_element_type=jnp.float32)
    h = jnp.maximum(h + b1_ref[...], 0.0)                       # (TB, 256)

    # Dropout: identity in eval mode.

    # --- Linear 256 -> 700 (700 == full last dim -> legal block) ---
    out = jnp.dot(h, w2_ref[...], preferred_element_type=jnp.float32)
    out = out + b2_ref[...]                                     # (TB, 700)

    o_ref[...] = out.astype(o_ref.dtype)


@jax.jit
def policy_head_forward(x, gamma, beta, w1, b1, w2, b2):
    """x: (B, 128) or (128,) float32 -> logits (B, 700) or (700,) float32."""
    squeeze = (x.ndim == 1)
    if squeeze:
        x = x[None, :]

    B = x.shape[0]
    TB = _pick_row_tile(B)
    grid = (pl.cdiv(B, TB),)   # ragged last block is masked by Pallas

    # Fold the LayerNorm affine into the first linear (tiny one-time ops):
    #   (xn * gamma + beta) @ w1 + b1 == xn @ (gamma[:,None]*w1) + (beta@w1 + b1)
    w1_f = gamma[:, None] * w1                                   # (128, 256)
    b1_f = (b1 + beta @ w1).reshape(1, HIDDEN_DIM)               # (1, 256)
    b2_2 = b2.reshape(1, OUTPUT_DIM)                             # (1, 700)

    out = pl.pallas_call(
        policy_head_kernel,
        out_shape=jax.ShapeDtypeStruct((B, OUTPUT_DIM), jnp.float32),
        grid_spec=pltpu.PrefetchScalarGridSpec(
            num_scalar_prefetch=0,
            grid=grid,
            in_specs=[
                pl.BlockSpec((TB, INPUT_DIM), lambda i: (i, 0)),
                # Params: constant index_map -> resident in VMEM across steps.
                pl.BlockSpec((INPUT_DIM, HIDDEN_DIM), lambda i: (0, 0)),
                pl.BlockSpec((1, HIDDEN_DIM), lambda i: (0, 0)),
                pl.BlockSpec((HIDDEN_DIM, OUTPUT_DIM), lambda i: (0, 0)),
                pl.BlockSpec((1, OUTPUT_DIM), lambda i: (0, 0)),
            ],
            out_specs=pl.BlockSpec((TB, OUTPUT_DIM), lambda i: (i, 0)),
        ),
        compiler_params=pltpu.CompilerParams(
            dimension_semantics=("parallel",)),
    )(x, w1_f, b1_f, w2, b2_2)

    if squeeze:
        out = out[0]
    return out


def init_params(key):
    """Deterministic init matching PolicyHead._initialize_weights
    (xavier_uniform weights, zero biases, default LayerNorm affine)."""
    k1, k2 = jax.random.split(key, 2)

    def xavier_uniform(k, fan_in, fan_out):
        bound = jnp.sqrt(6.0 / (fan_in + fan_out))
        # Stored (in, out); same distribution as PyTorch's (out, in) weight.
        return jax.random.uniform(k, (fan_in, fan_out), jnp.float32,
                                  minval=-bound, maxval=bound)

    gamma = jnp.ones((INPUT_DIM,), jnp.float32)
    beta = jnp.zeros((INPUT_DIM,), jnp.float32)
    w1 = xavier_uniform(k1, INPUT_DIM, HIDDEN_DIM)
    b1 = jnp.zeros((HIDDEN_DIM,), jnp.float32)
    w2 = xavier_uniform(k2, HIDDEN_DIM, OUTPUT_DIM)
    b2 = jnp.zeros((OUTPUT_DIM,), jnp.float32)
    return gamma, beta, w1, b1, w2, b2


def reference_forward(x, gamma, beta, w1, b1, w2, b2):
    mean = jnp.mean(x, axis=-1, keepdims=True)
    var = jnp.mean((x - mean) ** 2, axis=-1, keepdims=True)
    xn = (x - mean) / jnp.sqrt(var + LN_EPS) * gamma + beta
    h = jnp.maximum(xn @ w1 + b1, 0.0)
    return h @ w2 + b2


if __name__ == "__main__":
    key = jax.random.PRNGKey(0)
    k_params, k_x1, k_x2, k_x3, k_g, k_b = jax.random.split(key, 6)

    params = init_params(k_params)

    # Case 1: tiny batch (block rows > batch rows -> single masked tile).
    B1 = 2
    x1 = jax.random.normal(k_x1, (B1, INPUT_DIM), jnp.float32)
    out1 = jax.block_until_ready(policy_head_forward(x1, *params))
    ref1 = reference_forward(x1, *params)
    assert out1.shape == (B1, OUTPUT_DIM)
    assert jnp.allclose(out1, ref1, atol=1e-4, rtol=1e-4)

    # Case 2: ragged batch -> 2 grid steps with a masked tail block, plus a
    # non-default LayerNorm affine to exercise the gamma/beta fold.
    gamma2 = 1.0 + 0.1 * jax.random.normal(k_g, (INPUT_DIM,), jnp.float32)
    beta2 = 0.1 * jax.random.normal(k_b, (INPUT_DIM,), jnp.float32)
    params2 = (gamma2, beta2) + params[2:]
    B2 = 19
    x2 = jax.random.normal(k_x2, (B2, INPUT_DIM), jnp.float32)
    out2 = jax.block_until_ready(policy_head_forward(x2, *params2))
    ref2 = reference_forward(x2, *params2)
    assert out2.shape == (B2, OUTPUT_DIM)
    assert jnp.allclose(out2, ref2, atol=1e-4, rtol=1e-4)

    # Case 3: unbatched (128,) input, like the PyTorch module supports.
    x3 = jax.random.normal(k_x3, (INPUT_DIM,), jnp.float32)
    out3 = jax.block_until_ready(policy_head_forward(x3, *params))
    ref3 = reference_forward(x3[None, :], *params)[0]
    assert out3.shape == (OUTPUT_DIM,)
    assert jnp.allclose(out3, ref3, atol=1e-4, rtol=1e-4)

    print("KERNEL_OK")
</pallas_src>

<mosaic_0001>
module attributes {stable_mosaic.version = 11 : i64} {
  func.func @policy_head_kernel(%arg0: i32, %arg1: memref<8x128xf32, #tpu.memory_space<vmem>>, %arg2: memref<128x256xf32, #tpu.memory_space<vmem>>, %arg3: memref<1x256xf32, #tpu.memory_space<vmem>>, %arg4: memref<256x700xf32, #tpu.memory_space<vmem>>, %arg5: memref<1x700xf32, #tpu.memory_space<vmem>>, %arg6: memref<8x700xf32, #tpu.memory_space<vmem>>) attributes {dimension_semantics = [#tpu.dimension_semantics<parallel>], iteration_bounds = array<i64: 1>, scalar_prefetch = 0 : i64, scratch_operands = 0 : i64, tpu.core_type = #tpu.core_type<tc>, window_params = [{transform_indices = @transform_0, window_bounds = array<i64: 8, 128>}, {pipeline_mode = #tpu.pipeline_mode<synchronous>, transform_indices = @transform_1, window_bounds = array<i64: 128, 256>}, {pipeline_mode = #tpu.pipeline_mode<synchronous>, transform_indices = @transform_2, window_bounds = array<i64: 1, 256>}, {pipeline_mode = #tpu.pipeline_mode<synchronous>, transform_indices = @transform_3, window_bounds = array<i64: 256, 700>}, {pipeline_mode = #tpu.pipeline_mode<synchronous>, transform_indices = @transform_4, window_bounds = array<i64: 1, 700>}, {transform_indices = @transform_5, window_bounds = array<i64: 8, 700>}]} {
    %c0 = arith.constant 0 : index
    %c0_0 = arith.constant 0 : index
    %0 = vector.load %arg1[%c0, %c0_0] : memref<8x128xf32, #tpu.memory_space<vmem>>, vector<8x128xf32>
    %cst = arith.constant dense<0.000000e+00> : vector<8xf32>
    %1 = vector.multi_reduction <add>, %0, %cst [1] : vector<8x128xf32> to vector<8xf32>
    %2 = vector.shape_cast %1 : vector<8xf32> to vector<8x1xf32>
    %cst_1 = arith.constant 1.280000e+02 : f32
    %3 = vector.broadcast %cst_1 : f32 to vector<8x1xf32>
    %4 = arith.divf %2, %3 : vector<8x1xf32>
    %5 = vector.broadcast %4 : vector<8x1xf32> to vector<8x128xf32>
    %6 = arith.subf %0, %5 : vector<8x128xf32>
    %7 = arith.mulf %6, %6 : vector<8x128xf32>
    %cst_2 = arith.constant dense<0.000000e+00> : vector<8xf32>
    %8 = vector.multi_reduction <add>, %7, %cst_2 [1] : vector<8x128xf32> to vector<8xf32>
    %9 = vector.shape_cast %8 : vector<8xf32> to vector<8x1xf32>
    %cst_3 = arith.constant 1.280000e+02 : f32
    %10 = vector.broadcast %cst_3 : f32 to vector<8x1xf32>
    %11 = arith.divf %9, %10 : vector<8x1xf32>
    %cst_4 = arith.constant 9.99999974E-6 : f32
    %12 = vector.broadcast %cst_4 : f32 to vector<8x1xf32>
    %13 = arith.addf %11, %12 : vector<8x1xf32>
    %14 = math.rsqrt %13 : vector<8x1xf32>
    %15 = vector.broadcast %14 : vector<8x1xf32> to vector<8x128xf32>
    %16 = arith.mulf %6, %15 : vector<8x128xf32>
    %c0_5 = arith.constant 0 : index
    %c0_6 = arith.constant 0 : index
    %17 = vector.load %arg2[%c0_5, %c0_6] : memref<128x256xf32, #tpu.memory_space<vmem>>, vector<128x256xf32>
    %cst_7 = arith.constant dense<0.000000e+00> : vector<8x256xf32>
    %18 = tpu.matmul %16, %17, %cst_7 {dimension_numbers = #tpu.dot_dimension_numbers<[1], [0], [0], [1], [0, 0, 1, 1], [], []>} : vector<8x128xf32>, vector<128x256xf32>, vector<8x256xf32> -> vector<8x256xf32>
    %c0_8 = arith.constant 0 : index
    %c0_9 = arith.constant 0 : index
    %19 = vector.load %arg3[%c0_8, %c0_9] : memref<1x256xf32, #tpu.memory_space<vmem>>, vector<1x256xf32>
    %20 = vector.broadcast %19 : vector<1x256xf32> to vector<8x256xf32>
    %21 = arith.addf %18, %20 : vector<8x256xf32>
    %cst_10 = arith.constant 0.000000e+00 : f32
    %22 = vector.broadcast %cst_10 : f32 to vector<8x256xf32>
    %23 = arith.maximumf %21, %22 : vector<8x256xf32>
    %c0_11 = arith.constant 0 : index
    %c0_12 = arith.constant 0 : index
    %24 = vector.load %arg4[%c0_11, %c0_12] : memref<256x700xf32, #tpu.memory_space<vmem>>, vector<256x700xf32>
    %cst_13 = arith.constant dense<0.000000e+00> : vector<8x700xf32>
    %25 = tpu.matmul %23, %24, %cst_13 {dimension_numbers = #tpu.dot_dimension_numbers<[1], [0], [0], [1], [0, 0, 1, 1], [], []>} : vector<8x256xf32>, vector<256x700xf32>, vector<8x700xf32> -> vector<8x700xf32>
    %c0_14 = arith.constant 0 : index
    %c0_15 = arith.constant 0 : index
    %26 = vector.load %arg5[%c0_14, %c0_15] : memref<1x700xf32, #tpu.memory_space<vmem>>, vector<1x700xf32>
    %27 = vector.broadcast %26 : vector<1x700xf32> to vector<8x700xf32>
    %28 = arith.addf %25, %27 : vector<8x700xf32>
    %c0_16 = arith.constant 0 : index
    %c0_17 = arith.constant 0 : index
    %29 = vector.load %arg6[%c0_16, %c0_17] : memref<8x700xf32, #tpu.memory_space<vmem>>, vector<8x700xf32>
    tpu.vector_store %arg6[%c0_16, %c0_17], %28 {strides = array<i32>} : memref<8x700xf32, #tpu.memory_space<vmem>>, vector<8x700xf32>,
    return
  }
  func.func @transform_0(%arg0: i32) -> (i32, i32) {
    %c0_i32 = arith.constant 0 : i32
    %c0_i32_0 = arith.constant 0 : i32
    return %arg0, %c0_i32 : i32, i32
  }
  func.func @transform_1(%arg0: i32) -> (i32, i32) {
    %c0_i32 = arith.constant 0 : i32
    %c0_i32_0 = arith.constant 0 : i32
    %c0_i32_1 = arith.constant 0 : i32
    return %c0_i32, %c0_i32_0 : i32, i32
  }
  func.func @transform_2(%arg0: i32) -> (i32, i32) {
    %c0_i32 = arith.constant 0 : i32
    %c0_i32_0 = arith.constant 0 : i32
    %c0_i32_1 = arith.constant 0 : i32
    return %c0_i32, %c0_i32_0 : i32, i32
  }
  func.func @transform_3(%arg0: i32) -> (i32, i32) {
    %c0_i32 = arith.constant 0 : i32
    %c0_i32_0 = arith.constant 0 : i32
    %c0_i32_1 = arith.constant 0 : i32
    return %c0_i32, %c0_i32_0 : i32, i32
  }
  func.func @transform_4(%arg0: i32) -> (i32, i32) {
    %c0_i32 = arith.constant 0 : i32
    %c0_i32_0 = arith.constant 0 : i32
    %c0_i32_1 = arith.constant 0 : i32
    return %c0_i32, %c0_i32_0 : i32, i32
  }
  func.func @transform_5(%arg0: i32) -> (i32, i32) {
    %c0_i32 = arith.constant 0 : i32
    %c0_i32_0 = arith.constant 0 : i32
    return %arg0, %c0_i32 : i32, i32
  }
}

</mosaic_0001>

<llo_original>
// kernel: policy_head_forward.1
$region0: #{policy_head_forward.1}
  #allocation0 [shape = 'u32[]', space=smem, size = 0x4, offset = 0x4, fixed_abs, tag = 'smem constant byte address 0x4 - core index']
  #allocation1 [shape = 'u32[144,128]{1,0:T(1,128)}', space=vmem, size = 0x12000, scoped, tag = 'internal scratch']
  %s0 = inlined_call_operand.vmem [shape: f32[2,128], index: 0, kind: input, shape index: {}]
  %s1 = inlined_call_operand.vmem [shape: f32[128,256], index: 1, kind: input, shape index: {}]
  %s2 = inlined_call_operand.vmem [shape: f32[1,256], index: 2, kind: input, shape index: {}]
  %s3 = inlined_call_operand.vmem [shape: f32[256,700], index: 3, kind: input, shape index: {}]
  %s4 = inlined_call_operand.vmem [shape: f32[1,700], index: 4, kind: input, shape index: {}]
  %s5 = inlined_call_operand.hbm [shape: f32[2,700], index: 5, kind: output, shape index: {}]
  %s6 = sld [smem:[#allocation0]]
  $region30: #{policy_head_forward.1} parent=0
    _
  %s8 = ssub.s32 1, %s6
  %s9 = scalar_select 0, %s8, %s6
  $region1: #{policy_head_forward.1} parent=0
    #allocation2 [shape = 'u8[24576]{0}', space=vmem, size = 0x6000, scoped, tag = 'output window, operand 0, single buffered']
    #allocation3 [shape = 's32[1]{0}', space=sflag, size = 0x4, scoped, tag = 'scoped memory for policy_head_forward.1']
    %10 = vsyncpa [#allocation3], 0
    // Predicated region
    $region2: #{policy_head_forward.1} parent=1 // pred_check
      _
    $region3: #{policy_head_forward.1} parent=1 // pred_check_branch
      %12 = sbr.rel (0) target = $region5
    $region4: #{policy_head_forward.1} parent=1 // pred_region
      _
    $region5: #{policy_head_forward.1} parent=1 // pred_fallthru
      _
    // Predicated region
    $region6: #{policy_head_forward.1} parent=1 // pred_check
      _
    $region7: #{policy_head_forward.1} parent=1 // pred_check_branch
      %14 = sbr.rel (0) target = $region9
    $region8: #{policy_head_forward.1} parent=1 // pred_region
      _
    $region9: #{policy_head_forward.1} parent=1 // pred_fallthru
      _
    // Predicated region
    $region10: #{policy_head_forward.1} parent=1 // pred_check
      _
    $region11: #{policy_head_forward.1} parent=1 // pred_check_branch
      %16 = sbr.rel (0) target = $region13
    $region12: #{policy_head_forward.1} parent=1 // pred_region
      _
    $region13: #{policy_head_forward.1} parent=1 // pred_fallthru
      _
    // Predicated region
    $region14: #{policy_head_forward.1} parent=1 // pred_check
      _
    $region15: #{policy_head_forward.1} parent=1 // pred_check_branch
      %18 = sbr.rel (0) target = $region17
    $region16: #{policy_head_forward.1} parent=1 // pred_region
      _
    $region17: #{policy_head_forward.1} parent=1 // pred_fallthru
      _
    // Predicated region
    $region18: #{policy_head_forward.1} parent=1 // pred_check
      _
    $region19: #{policy_head_forward.1} parent=1 // pred_check_branch
      %20 = sbr.rel (0) target = $region21
    $region20: #{policy_head_forward.1} parent=1 // pred_region
      _
    $region21: #{policy_head_forward.1} parent=1 // pred_fallthru
      _
    %v21 = vld [vmem:[%s0] sm:$0xff]
    %22 = vadd.xlane.f32.xlu0 %v21
    %v23 = vpop.xlane.xlu0 %22
    %v24 = vrcp.pop 128.0
    %v25 = vmul.f32 %v23, %v24
    %v26 = vsub.f32 %v21, %v25
    %v27 = vmul.f32 %v26, %v26
    %28 = vadd.xlane.f32.xlu0 %v27
    %v29 = vpop.xlane.xlu0 %28
    %v30 = vmul.f32 %v29, %v24
    %v31 = vadd.f32 %v30, 1e-05
    %v32 = vrsqrt.pop %v31
    %v33 = vmul.f32 %v26, %v32
    %v34 = vld [vmem:[%s1] sm:$0xff]
    %v35 = vld [vmem:[%s1 + $0x8] sm:$0xff]
    %v36 = vld [vmem:[%s1 + $0x10] sm:$0xff]
    %v37 = vld [vmem:[%s1 + $0x18] sm:$0xff]
    %v38 = vld [vmem:[%s1 + $0x20] sm:$0xff]
    %v39 = vld [vmem:[%s1 + $0x28] sm:$0xff]
    %v40 = vld [vmem:[%s1 + $0x30] sm:$0xff]
    %v41 = vld [vmem:[%s1 + $0x38] sm:$0xff]
    %v42 = vld [vmem:[%s1 + $0x40] sm:$0xff]
    %v43 = vld [vmem:[%s1 + $0x48] sm:$0xff]
    %v44 = vld [vmem:[%s1 + $0x50] sm:$0xff]
    %v45 = vld [vmem:[%s1 + $0x58] sm:$0xff]
    %v46 = vld [vmem:[%s1 + $0x60] sm:$0xff]
    %v47 = vld [vmem:[%s1 + $0x68] sm:$0xff]
    %v48 = vld [vmem:[%s1 + $0x70] sm:$0xff]
    %v49 = vld [vmem:[%s1 + $0x78] sm:$0xff]
    %v50 = vld [vmem:[%s1 + $0x80] sm:$0xff]
    %v51 = vld [vmem:[%s1 + $0x88] sm:$0xff]
    %v52 = vld [vmem:[%s1 + $0x90] sm:$0xff]
    %v53 = vld [vmem:[%s1 + $0x98] sm:$0xff]
    %v54 = vld [vmem:[%s1 + $0xa0] sm:$0xff]
    %v55 = vld [vmem:[%s1 + $0xa8] sm:$0xff]
    %v56 = vld [vmem:[%s1 + $0xb0] sm:$0xff]
    %v57 = vld [vmem:[%s1 + $0xb8] sm:$0xff]
    %v58 = vld [vmem:[%s1 + $0xc0] sm:$0xff]
    %v59 = vld [vmem:[%s1 + $0xc8] sm:$0xff]
    %v60 = vld [vmem:[%s1 + $0xd0] sm:$0xff]
    %v61 = vld [vmem:[%s1 + $0xd8] sm:$0xff]
    %v62 = vld [vmem:[%s1 + $0xe0] sm:$0xff]
    %v63 = vld [vmem:[%s1 + $0xe8] sm:$0xff]
    %v64 = vld [vmem:[%s1 + $0xf0] sm:$0xff]
    %v65 = vld [vmem:[%s1 + $0xf8] sm:$0xff]
    %v66 = vld [vmem:[%s2] sm:$0x3]
    %v68 = vlaneseq
    %v69 = vshrl.u32 %v68, 7
    %v70 = vsub.s32 0, %v69
    %v71 = vrot.slane %v66, %v70
    %v72 = vlaneseq
    %v73 = vshrl.u32 %v72, 7
    %v74 = vsub.s32 1, %v73
    %v75 = vrot.slane %v66, %v74
    %78 = vmatprep.subr.mxu0 %v65
    %79 = vmatpush1.msra.mxu0 %v64
    %80 = vmatprep.subr.mxu0 %v63
    %81 = vmatpush1.msra.mxu0 %v62
    %82 = vmatprep.subr.mxu0 %v61
    %83 = vmatpush1.msra.mxu0 %v60
    %84 = vmatprep.subr.mxu0 %v59
    %85 = vmatpush1.msra.mxu0 %v58
    %86 = vmatprep.subr.mxu0 %v57
    %87 = vmatpush1.msra.mxu0 %v56
    %88 = vmatprep.subr.mxu0 %v55
    %89 = vmatpush1.msra.mxu0 %v54
    %90 = vmatprep.subr.mxu0 %v53
    %91 = vmatpush1.msra.mxu0 %v52
    %92 = vmatprep.subr.mxu0 %v51
    %93 = vmatpush1.msra.mxu0 %v50
    %94 = vmatprep.subr.mxu0 %v49
    %95 = vmatpush1.msra.mxu0 %v48
    %96 = vmatprep.subr.mxu0 %v47
    %97 = vmatpush1.msra.mxu0 %v46
    %98 = vmatprep.subr.mxu0 %v45
    %99 = vmatpush1.msra.mxu0 %v44
    %100 = vmatprep.subr.mxu0 %v43
    %101 = vmatpush1.msra.mxu0 %v42
    %102 = vmatprep.subr.mxu0 %v41
    %103 = vmatpush1.msra.mxu0 %v40
    %104 = vmatprep.subr.mxu0 %v39
    %105 = vmatpush1.msra.mxu0 %v38
    %106 = vmatprep.subr.mxu0 %v37
    %107 = vmatpush1.msra.mxu0 %v36
    %108 = vmatprep.subr.mxu0 %v35
    %109 = vmatpush1.msra.mxu0 %v34
    %110 = vmatprep.subr.mxu0 0.0
    %111 = vmatpush2.msra.mxu0 0.0
    %112 = vmatprep.subr.mxu0 0.0
    %113 = vmatpush2.msra.mxu0 0.0
    %114 = vmatprep.subr.mxu0 0.0
    %115 = vmatpush2.msra.mxu0 0.0
    %116 = vmatprep.subr.mxu0 0.0
    %117 = vmatpush2.msra.mxu0 0.0
    %118 = vmatprep.subr.mxu0 0.0
    %119 = vmatpush2.msra.mxu0 0.0
    %120 = vmatprep.subr.mxu0 0.0
    %121 = vmatpush2.msra.mxu0 0.0
    %122 = vmatprep.subr.mxu0 0.0
    %123 = vmatpush2.msra.mxu0 0.0
    %124 = vmatprep.subr.mxu0 0.0
    %125 = vmatpush2.msra.mxu0 0.0
    %126 = vmatprep.subr.mxu0 0.0
    %127 = vmatpush2.msra.mxu0 0.0
    %128 = vmatprep.subr.mxu0 0.0
    %129 = vmatpush2.msra.mxu0 0.0
    %130 = vmatprep.subr.mxu0 0.0
    %131 = vmatpush2.msra.mxu0 0.0
    %132 = vmatprep.subr.mxu0 0.0
    %133 = vmatpush2.msra.mxu0 0.0
    %134 = vmatprep.subr.mxu0 0.0
    %135 = vmatpush2.msra.mxu0 0.0
    %136 = vmatprep.subr.mxu0 0.0
    %137 = vmatpush2.msra.mxu0 0.0
    %138 = vmatprep.subr.mxu0 0.0
    %139 = vmatpush2.msra.mxu0 0.0
    %140 = vmatprep.subr.mxu0 0.0
    %141 = vmatpush2.msra.mxu0 0.0
    %142 = vmatprep.mubr.f32.mxu0 0.0
    %143 = vmatmul.mubr.f32.gmra.mxu0 %v33
    %v144 = vpop.f32.mrf.mxu0
    %v145 = vadd.f32 %v71, %v144
    %v146 = vpop.f32.mrf.mxu0
    %v147 = vadd.f32 %v75, %v146
    %148 = vdwg.mxu0
    %v149 = vmax.f32 %v145, 0.0
    %v150 = vmax.f32 %v147, 0.0
    %v151 = vld [vmem:[%s3] sm:$0xff]
    %v152 = vld [vmem:[%s3 + $0x8] sm:$0xff]
    %v153 = vld [vmem:[%s3 + $0x10] sm:$0xff]
    %v154 = vld [vmem:[%s3 + $0x18] sm:$0xff]
    %v155 = vld [vmem:[%s3 + $0x20] sm:$0xff]
    %v156 = vld [vmem:[%s3 + $0x28] sm:$0xff]
    %v157 = vld [vmem:[%s3 + $0x30] sm:$0xff]
    %v158 = vld [vmem:[%s3 + $0x38] sm:$0xff]
    %v159 = vld [vmem:[%s3 + $0x40] sm:$0xff]
    %v160 = vld [vmem:[%s3 + $0x48] sm:$0xff]
    %v161 = vld [vmem:[%s3 + $0x50] sm:$0xff]
    %v162 = vld [vmem:[%s3 + $0x58] sm:$0xff]
    %v163 = vld [vmem:[%s3 + $0x60] sm:$0xff]
    %v164 = vld [vmem:[%s3 + $0x68] sm:$0xff]
    %v165 = vld [vmem:[%s3 + $0x70] sm:$0xff]
    %v166 = vld [vmem:[%s3 + $0x78] sm:$0xff]
    %v167 = vld [vmem:[%s3 + $0x80] sm:$0xff]
    %v168 = vld [vmem:[%s3 + $0x88] sm:$0xff]
    %v169 = vld [vmem:[%s3 + $0x90] sm:$0xff]
    %v170 = vld [vmem:[%s3 + $0x98] sm:$0xff]
    %v171 = vld [vmem:[%s3 + $0xa0] sm:$0xff]
    %v172 = vld [vmem:[%s3 + $0xa8] sm:$0xff]
    %v173 = vld [vmem:[%s3 + $0xb0] sm:$0xff]
    %v174 = vld [vmem:[%s3 + $0xb8] sm:$0xff]
    %v175 = vld [vmem:[%s3 + $0xc0] sm:$0xff]
    %v176 = vld [vmem:[%s3 + $0xc8] sm:$0xff]
    %v177 = vld [vmem:[%s3 + $0xd0] sm:$0xff]
    %v178 = vld [vmem:[%s3 + $0xd8] sm:$0xff]
    %v179 = vld [vmem:[%s3 + $0xe0] sm:$0xff]
    %v180 = vld [vmem:[%s3 + $0xe8] sm:$0xff]
    %v181 = vld [vmem:[%s3 + $0xf0] sm:$0xff]
    %v182 = vld [vmem:[%s3 + $0xf8] sm:$0xff]
    %v183 = vld [vmem:[%s3 + $0x100] sm:$0xff]
    %v184 = vld [vmem:[%s3 + $0x108] sm:$0xff]
    %v185 = vld [vmem:[%s3 + $0x110] sm:$0xff]
    %v186 = vld [vmem:[%s3 + $0x118] sm:$0xff]
    %v187 = vld [vmem:[%s3 + $0x120] sm:$0xff]
    %v188 = vld [vmem:[%s3 + $0x128] sm:$0xff]
    %v189 = vld [vmem:[%s3 + $0x130] sm:$0xff]
    %v190 = vld [vmem:[%s3 + $0x138] sm:$0xff]
    %v191 = vld [vmem:[%s3 + $0x140] sm:$0xff]
    %v192 = vld [vmem:[%s3 + $0x148] sm:$0xff]
    %v193 = vld [vmem:[%s3 + $0x150] sm:$0xff]
    %v194 = vld [vmem:[%s3 + $0x158] sm:$0xff]
    %v195 = vld [vmem:[%s3 + $0x160] sm:$0xff]
    %v196 = vld [vmem:[%s3 + $0x168] sm:$0xff]
    %v197 = vld [vmem:[%s3 + $0x170] sm:$0xff]
    %v198 = vld [vmem:[%s3 + $0x178] sm:$0xff]
    %v199 = vld [vmem:[%s3 + $0x180] sm:$0xff]
    %v200 = vld [vmem:[%s3 + $0x188] sm:$0xff]
    %v201 = vld [vmem:[%s3 + $0x190] sm:$0xff]
    %v202 = vld [vmem:[%s3 + $0x198] sm:$0xff]
    %v203 = vld [vmem:[%s3 + $0x1a0] sm:$0xff]
    %v204 = vld [vmem:[%s3 + $0x1a8] sm:$0xff]
    %v205 = vld [vmem:[%s3 + $0x1b0] sm:$0xff]
    %v206 = vld [vmem:[%s3 + $0x1b8] sm:$0xff]
    %v207 = vld [vmem:[%s3 + $0x1c0] sm:$0xff]
    %v208 = vld [vmem:[%s3 + $0x1c8] sm:$0xff]
    %v209 = vld [vmem:[%s3 + $0x1d0] sm:$0xff]
    %v210 = vld [vmem:[%s3 + $0x1d8] sm:$0xff]
    %v211 = vld [vmem:[%s3 + $0x1e0] sm:$0xff]
    %v212 = vld [vmem:[%s3 + $0x1e8] sm:$0xff]
    %v213 = vld [vmem:[%s3 + $0x1f0] sm:$0xff]
    %v214 = vld [vmem:[%s3 + $0x1f8] sm:$0xff]
    %v215 = vld [vmem:[%s3 + $0x200] sm:$0xff]
    %v216 = vld [vmem:[%s3 + $0x208] sm:$0xff]
    %v217 = vld [vmem:[%s3 + $0x210] sm:$0xff]
    %v218 = vld [vmem:[%s3 + $0x218] sm:$0xff]
    %v219 = vld [vmem:[%s3 + $0x220] sm:$0xff]
    %v220 = vld [vmem:[%s3 + $0x228] sm:$0xff]
    %v221 = vld [vmem:[%s3 + $0x230] sm:$0xff]
    %v222 = vld [vmem:[%s3 + $0x238] sm:$0xff]
    %v223 = vld [vmem:[%s3 + $0x240] sm:$0xff]
    %v224 = vld [vmem:[%s3 + $0x248] sm:$0xff]
    %v225 = vld [vmem:[%s3 + $0x250] sm:$0xff]
    %v226 = vld [vmem:[%s3 + $0x258] sm:$0xff]
    %v227 = vld [vmem:[%s3 + $0x260] sm:$0xff]
    %v228 = vld [vmem:[%s3 + $0x268] sm:$0xff]
    %v229 = vld [vmem:[%s3 + $0x270] sm:$0xff]
    %v230 = vld [vmem:[%s3 + $0x278] sm:$0xff]
    %v231 = vld [vmem:[%s3 + $0x280] sm:$0xff]
    %v232 = vld [vmem:[%s3 + $0x288] sm:$0xff]
    %v233 = vld [vmem:[%s3 + $0x290] sm:$0xff]
    %v234 = vld [vmem:[%s3 + $0x298] sm:$0xff]
    %v235 = vld [vmem:[%s3 + $0x2a0] sm:$0xff]
    %v236 = vld [vmem:[%s3 + $0x2a8] sm:$0xff]
    %v237 = vld [vmem:[%s3 + $0x2b0] sm:$0xff]
    %v238 = vld [vmem:[%s3 + $0x2b8] sm:$0xff]
    %v239 = vld [vmem:[%s3 + $0x2c0] sm:$0xff]
    %v240 = vld [vmem:[%s3 + $0x2c8] sm:$0xff]
    %v241 = vld [vmem:[%s3 + $0x2d0] sm:$0xff]
    %v242 = vld [vmem:[%s3 + $0x2d8] sm:$0xff]
    %v243 = vld [vmem:[%s3 + $0x2e0] sm:$0xff]
    %v244 = vld [vmem:[%s3 + $0x2e8] sm:$0xff]
    %v245 = vld [vmem:[%s3 + $0x2f0] sm:$0xff]
    %v246 = vld [vmem:[%s3 + $0x2f8] sm:$0xff]
    %v247 = vld [vmem:[%s3 + $0x300] sm:$0xff]
    %v248 = vld [vmem:[%s3 + $0x308] sm:$0xff]
    %v249 = vld [vmem:[%s3 + $0x310] sm:$0xff]
    %v250 = vld [vmem:[%s3 + $0x318] sm:$0xff]
    %v251 = vld [vmem:[%s3 + $0x320] sm:$0xff]
    %v252 = vld [vmem:[%s3 + $0x328] sm:$0xff]
    %v253 = vld [vmem:[%s3 + $0x330] sm:$0xff]
    %v254 = vld [vmem:[%s3 + $0x338] sm:$0xff]
    %v255 = vld [vmem:[%s3 + $0x340] sm:$0xff]
    %v256 = vld [vmem:[%s3 + $0x348] sm:$0xff]
    %v257 = vld [vmem:[%s3 + $0x350] sm:$0xff]
    %v258 = vld [vmem:[%s3 + $0x358] sm:$0xff]
    %v259 = vld [vmem:[%s3 + $0x360] sm:$0xff]
    %v260 = vld [vmem:[%s3 + $0x368] sm:$0xff]
    %v261 = vld [vmem:[%s3 + $0x370] sm:$0xff]
    %v262 = vld [vmem:[%s3 + $0x378] sm:$0xff]
    %v263 = vld [vmem:[%s3 + $0x380] sm:$0xff]
    %v264 = vld [vmem:[%s3 + $0x388] sm:$0xff]
    %v265 = vld [vmem:[%s3 + $0x390] sm:$0xff]
    %v266 = vld [vmem:[%s3 + $0x398] sm:$0xff]
    %v267 = vld [vmem:[%s3 + $0x3a0] sm:$0xff]
    %v268 = vld [vmem:[%s3 + $0x3a8] sm:$0xff]
    %v269 = vld [vmem:[%s3 + $0x3b0] sm:$0xff]
    %v270 = vld [vmem:[%s3 + $0x3b8] sm:$0xff]
    %v271 = vld [vmem:[%s3 + $0x3c0] sm:$0xff]
    %v272 = vld [vmem:[%s3 + $0x3c8] sm:$0xff]
    %v273 = vld [vmem:[%s3 + $0x3d0] sm:$0xff]
    %v274 = vld [vmem:[%s3 + $0x3d8] sm:$0xff]
    %v275 = vld [vmem:[%s3 + $0x3e0] sm:$0xff]
    %v276 = vld [vmem:[%s3 + $0x3e8] sm:$0xff]
    %v277 = vld [vmem:[%s3 + $0x3f0] sm:$0xff]
    %v278 = vld [vmem:[%s3 + $0x3f8] sm:$0xff]
    %v279 = vld [vmem:[%s3 + $0x400] sm:$0xff]
    %v280 = vld [vmem:[%s3 + $0x408] sm:$0xff]
    %v281 = vld [vmem:[%s3 + $0x410] sm:$0xff]
    %v282 = vld [vmem:[%s3 + $0x418] sm:$0xff]
    %v283 = vld [vmem:[%s3 + $0x420] sm:$0xff]
    %v284 = vld [vmem:[%s3 + $0x428] sm:$0xff]
    %v285 = vld [vmem:[%s3 + $0x430] sm:$0xff]
    %v286 = vld [vmem:[%s3 + $0x438] sm:$0xff]
    %v287 = vld [vmem:[%s3 + $0x440] sm:$0xff]
    %v288 = vld [vmem:[%s3 + $0x448] sm:$0xff]
    %v289 = vld [vmem:[%s3 + $0x450] sm:$0xff]
    %v290 = vld [vmem:[%s3 + $0x458] sm:$0xff]
    %v291 = vld [vmem:[%s3 + $0x460] sm:$0xff]
    %v292 = vld [vmem:[%s3 + $0x468] sm:$0xff]
    %v293 = vld [vmem:[%s3 + $0x470] sm:$0xff]
    %v294 = vld [vmem:[%s3 + $0x478] sm:$0xff]
    %v295 = vld [vmem:[%s3 + $0x480] sm:$0xff]
    %v296 = vld [vmem:[%s3 + $0x488] sm:$0xff]
    %v297 = vld [vmem:[%s3 + $0x490] sm:$0xff]
    %v298 = vld [vmem:[%s3 + $0x498] sm:$0xff]
    %v299 = vld [vmem:[%s3 + $0x4a0] sm:$0xff]
    %v300 = vld [vmem:[%s3 + $0x4a8] sm:$0xff]
    %v301 = vld [vmem:[%s3 + $0x4b0] sm:$0xff]
    %v302 = vld [vmem:[%s3 + $0x4b8] sm:$0xff]
    %v303 = vld [vmem:[%s3 + $0x4c0] sm:$0xff]
    %v304 = vld [vmem:[%s3 + $0x4c8] sm:$0xff]
    %v305 = vld [vmem:[%s3 + $0x4d0] sm:$0xff]
    %v306 = vld [vmem:[%s3 + $0x4d8] sm:$0xff]
    %v307 = vld [vmem:[%s3 + $0x4e0] sm:$0xff]
    %v308 = vld [vmem:[%s3 + $0x4e8] sm:$0xff]
    %v309 = vld [vmem:[%s3 + $0x4f0] sm:$0xff]
    %v310 = vld [vmem:[%s3 + $0x4f8] sm:$0xff]
    %v311 = vld [vmem:[%s3 + $0x500] sm:$0xff]
    %v312 = vld [vmem:[%s3 + $0x508] sm:$0xff]
    %v313 = vld [vmem:[%s3 + $0x510] sm:$0xff]
    %v314 = vld [vmem:[%s3 + $0x518] sm:$0xff]
    %v315 = vld [vmem:[%s3 + $0x520] sm:$0xff]
    %v316 = vld [vmem:[%s3 + $0x528] sm:$0xff]
    %v317 = vld [vmem:[%s3 + $0x530] sm:$0xff]
    %v318 = vld [vmem:[%s3 + $0x538] sm:$0xff]
    %v319 = vld [vmem:[%s3 + $0x540] sm:$0xff]
    %v320 = vld [vmem:[%s3 + $0x548] sm:$0xff]
    %v321 = vld [vmem:[%s3 + $0x550] sm:$0xff]
    %v322 = vld [vmem:[%s3 + $0x558] sm:$0xff]
    %v323 = vld [vmem:[%s3 + $0x560] sm:$0xff]
    %v324 = vld [vmem:[%s3 + $0x568] sm:$0xff]
    %v325 = vld [vmem:[%s3 + $0x570] sm:$0xff]
    %v326 = vld [vmem:[%s3 + $0x578] sm:$0xff]
    %v327 = vld [vmem:[%s3 + $0x580] sm:$0xff]
    %v328 = vld [vmem:[%s3 + $0x588] sm:$0xff]
    %v329 = vld [vmem:[%s3 + $0x590] sm:$0xff]
    %v330 = vld [vmem:[%s3 + $0x598] sm:$0xff]
    %v331 = vld [vmem:[%s3 + $0x5a0] sm:$0xff]
    %v332 = vld [vmem:[%s3 + $0x5a8] sm:$0xff]
    %v333 = vld [vmem:[%s3 + $0x5b0] sm:$0xff]
    %v334 = vld [vmem:[%s3 + $0x5b8] sm:$0xff]
    %v335 = vld [vmem:[%s3 + $0x5c0] sm:$0xff]
    %v336 = vld [vmem:[%s3 + $0x5c8] sm:$0xff]
    %v337 = vld [vmem:[%s3 + $0x5d0] sm:$0xff]
    %v338 = vld [vmem:[%s3 + $0x5d8] sm:$0xff]
    %v339 = vld [vmem:[%s3 + $0x5e0] sm:$0xff]
    %v340 = vld [vmem:[%s3 + $0x5e8] sm:$0xff]
    %v341 = vld [vmem:[%s3 + $0x5f0] sm:$0xff]
    %v342 = vld [vmem:[%s3 + $0x5f8] sm:$0xff]
    %v343 = vld [vmem:[%s4] sm:$0x3f]
    %v345 = vlaneseq
    %v346 = vshrl.u32 %v345, 7
    %v347 = vsub.s32 0, %v346
    %v348 = vrot.slane %v343, %v347
    %v349 = vlaneseq
    %v350 = vshrl.u32 %v349, 7
    %v351 = vsub.s32 1, %v350
    %v352 = vrot.slane %v343, %v351
    %v353 = vlaneseq
    %v354 = vshrl.u32 %v353, 7
    %v355 = vsub.s32 2, %v354
    %v356 = vrot.slane %v343, %v355
    %v357 = vlaneseq
    %v358 = vshrl.u32 %v357, 7
    %v359 = vsub.s32 3, %v358
    %v360 = vrot.slane %v343, %v359
    %v361 = vlaneseq
    %v362 = vshrl.u32 %v361, 7
    %v363 = vsub.s32 4, %v362
    %v364 = vrot.slane %v343, %v363
    %v365 = vlaneseq
    %v366 = vshrl.u32 %v365, 7
    %v367 = vsub.s32 5, %v366
    %v368 = vrot.slane %v343, %v367
    %375 = vmatprep.subr.mxu0 %v242
    %376 = vmatpush1.msra.mxu0 %v241
    %377 = vmatprep.subr.mxu0 %v236
    %378 = vmatpush1.msra.mxu0 %v235
    %379 = vmatprep.subr.mxu0 %v230
    %380 = vmatpush1.msra.mxu0 %v229
    %381 = vmatprep.subr.mxu0 %v224
    %382 = vmatpush1.msra.mxu0 %v223
    %383 = vmatprep.subr.mxu0 %v218
    %384 = vmatpush1.msra.mxu0 %v217
    %385 = vmatprep.subr.mxu0 %v212
    %386 = vmatpush1.msra.mxu0 %v211
    %387 = vmatprep.subr.mxu0 %v206
    %388 = vmatpush1.msra.mxu0 %v205
    %389 = vmatprep.subr.mxu0 %v200
    %390 = vmatpush1.msra.mxu0 %v199
    %391 = vmatprep.subr.mxu0 %v194
    %392 = vmatpush1.msra.mxu0 %v193
    %393 = vmatprep.subr.mxu0 %v188
    %394 = vmatpush1.msra.mxu0 %v187
    %395 = vmatprep.subr.mxu0 %v182
    %396 = vmatpush1.msra.mxu0 %v181
    %397 = vmatprep.subr.mxu0 %v176
    %398 = vmatpush1.msra.mxu0 %v175
    %399 = vmatprep.subr.mxu0 %v170
    %400 = vmatpush1.msra.mxu0 %v169
    %401 = vmatprep.subr.mxu0 %v164
    %402 = vmatpush1.msra.mxu0 %v163
    %403 = vmatprep.subr.mxu0 %v158
    %404 = vmatpush1.msra.mxu0 %v157
    %405 = vmatprep.subr.mxu0 %v152
    %406 = vmatpush1.msra.mxu0 %v151
    %407 = vmatprep.subr.mxu0 %v338
    %408 = vmatpush2.msra.mxu0 %v337
    %409 = vmatprep.subr.mxu0 %v332
    %410 = vmatpush2.msra.mxu0 %v331
    %411 = vmatprep.subr.mxu0 %v326
    %412 = vmatpush2.msra.mxu0 %v325
    %413 = vmatprep.subr.mxu0 %v320
    %414 = vmatpush2.msra.mxu0 %v319
    %415 = vmatprep.subr.mxu0 %v314
    %416 = vmatpush2.msra.mxu0 %v313
    %417 = vmatprep.subr.mxu0 %v308
    %418 = vmatpush2.msra.mxu0 %v307
    %419 = vmatprep.subr.mxu0 %v302
    %420 = vmatpush2.msra.mxu0 %v301
    %421 = vmatprep.subr.mxu0 %v296
    %422 = vmatpush2.msra.mxu0 %v295
    %423 = vmatprep.subr.mxu0 %v290
    %424 = vmatpush2.msra.mxu0 %v289
    %425 = vmatprep.subr.mxu0 %v284
    %426 = vmatpush2.msra.mxu0 %v283
    %427 = vmatprep.subr.mxu0 %v278
    %428 = vmatpush2.msra.mxu0 %v277
    %429 = vmatprep.subr.mxu0 %v272
    %430 = vmatpush2.msra.mxu0 %v271
    %431 = vmatprep.subr.mxu0 %v266
    %432 = vmatpush2.msra.mxu0 %v265
    %433 = vmatprep.subr.mxu0 %v260
    %434 = vmatpush2.msra.mxu0 %v259
    %435 = vmatprep.subr.mxu0 %v254
    %436 = vmatpush2.msra.mxu0 %v253
    %437 = vmatprep.subr.mxu0 %v248
    %438 = vmatpush2.msra.mxu0 %v247
    %439 = vmatprep.mubr.f32.mxu0 %v150
    %440 = vmatmul.mubr.f32.gmra.mxu0 %v149
    %v441 = vpop.f32.mrf.mxu0
    %v442 = vadd.f32 %v348, %v441
    %v443 = vpop.f32.mrf.mxu0
    %v444 = vadd.f32 %v352, %v443
    %445 = vdwg.mxu0
    %446 = vmatprep.subr.mxu0 %v244
    %447 = vmatpush1.msra.mxu0 %v243
    %448 = vmatprep.subr.mxu0 %v238
    %449 = vmatpush1.msra.mxu0 %v237
    %450 = vmatprep.subr.mxu0 %v232
    %451 = vmatpush1.msra.mxu0 %v231
    %452 = vmatprep.subr.mxu0 %v226
    %453 = vmatpush1.msra.mxu0 %v225
    %454 = vmatprep.subr.mxu0 %v220
    %455 = vmatpush1.msra.mxu0 %v219
    %456 = vmatprep.subr.mxu0 %v214
    %457 = vmatpush1.msra.mxu0 %v213
    %458 = vmatprep.subr.mxu0 %v208
    %459 = vmatpush1.msra.mxu0 %v207
    %460 = vmatprep.subr.mxu0 %v202
    %461 = vmatpush1.msra.mxu0 %v201
    %462 = vmatprep.subr.mxu0 %v196
    %463 = vmatpush1.msra.mxu0 %v195
    %464 = vmatprep.subr.mxu0 %v190
    %465 = vmatpush1.msra.mxu0 %v189
    %466 = vmatprep.subr.mxu0 %v184
    %467 = vmatpush1.msra.mxu0 %v183
    %468 = vmatprep.subr.mxu0 %v178
    %469 = vmatpush1.msra.mxu0 %v177
    %470 = vmatprep.subr.mxu0 %v172
    %471 = vmatpush1.msra.mxu0 %v171
    %472 = vmatprep.subr.mxu0 %v166
    %473 = vmatpush1.msra.mxu0 %v165
    %474 = vmatprep.subr.mxu0 %v160
    %475 = vmatpush1.msra.mxu0 %v159
    %476 = vmatprep.subr.mxu0 %v154
    %477 = vmatpush1.msra.mxu0 %v153
    %478 = vmatprep.subr.mxu0 %v340
    %479 = vmatpush2.msra.mxu0 %v339
    %480 = vmatprep.subr.mxu0 %v334
    %481 = vmatpush2.msra.mxu0 %v333
    %482 = vmatprep.subr.mxu0 %v328
    %483 = vmatpush2.msra.mxu0 %v327
    %484 = vmatprep.subr.mxu0 %v322
    %485 = vmatpush2.msra.mxu0 %v321
    %486 = vmatprep.subr.mxu0 %v316
    %487 = vmatpush2.msra.mxu0 %v315
    %488 = vmatprep.subr.mxu0 %v310
    %489 = vmatpush2.msra.mxu0 %v309
    %490 = vmatprep.subr.mxu0 %v304
    %491 = vmatpush2.msra.mxu0 %v303
    %492 = vmatprep.subr.mxu0 %v298
    %493 = vmatpush2.msra.mxu0 %v297
    %494 = vmatprep.subr.mxu0 %v292
    %495 = vmatpush2.msra.mxu0 %v291
    %496 = vmatprep.subr.mxu0 %v286
    %497 = vmatpush2.msra.mxu0 %v285
    %498 = vmatprep.subr.mxu0 %v280
    %499 = vmatpush2.msra.mxu0 %v279
    %500 = vmatprep.subr.mxu0 %v274
    %501 = vmatpush2.msra.mxu0 %v273
    %502 = vmatprep.subr.mxu0 %v268
    %503 = vmatpush2.msra.mxu0 %v267
    %504 = vmatprep.subr.mxu0 %v262
    %505 = vmatpush2.msra.mxu0 %v261
    %506 = vmatprep.subr.mxu0 %v256
    %507 = vmatpush2.msra.mxu0 %v255
    %508 = vmatprep.subr.mxu0 %v250
    %509 = vmatpush2.msra.mxu0 %v249
    %510 = vmatprep.mubr.f32.mxu0 %v150
    %511 = vmatmul.mubr.f32.gmra.mxu0 %v149
    %v512 = vpop.f32.mrf.mxu0
    %v513 = vadd.f32 %v356, %v512
    %v514 = vpop.f32.mrf.mxu0
    %v515 = vadd.f32 %v360, %v514
    %516 = vdwg.mxu0
    %517 = vmatprep.subr.mxu0 %v246
    %518 = vmatpush1.msra.mxu0 %v245
    %519 = vmatprep.subr.mxu0 %v240
    %520 = vmatpush1.msra.mxu0 %v239
    %521 = vmatprep.subr.mxu0 %v234
    %522 = vmatpush1.msra.mxu0 %v233
    %523 = vmatprep.subr.mxu0 %v228
    %524 = vmatpush1.msra.mxu0 %v227
    %525 = vmatprep.subr.mxu0 %v222
    %526 = vmatpush1.msra.mxu0 %v221
    %527 = vmatprep.subr.mxu0 %v216
    %528 = vmatpush1.msra.mxu0 %v215
    %529 = vmatprep.subr.mxu0 %v210
    %530 = vmatpush1.msra.mxu0 %v209
    %531 = vmatprep.subr.mxu0 %v204
    %532 = vmatpush1.msra.mxu0 %v203
    %533 = vmatprep.subr.mxu0 %v198
    %534 = vmatpush1.msra.mxu0 %v197
    %535 = vmatprep.subr.mxu0 %v192
    %536 = vmatpush1.msra.mxu0 %v191
    %537 = vmatprep.subr.mxu0 %v186
    %538 = vmatpush1.msra.mxu0 %v185
    %539 = vmatprep.subr.mxu0 %v180
    %540 = vmatpush1.msra.mxu0 %v179
    %541 = vmatprep.subr.mxu0 %v174
    %542 = vmatpush1.msra.mxu0 %v173
    %543 = vmatprep.subr.mxu0 %v168
    %544 = vmatpush1.msra.mxu0 %v167
    %545 = vmatprep.subr.mxu0 %v162
    %546 = vmatpush1.msra.mxu0 %v161
    %547 = vmatprep.subr.mxu0 %v156
    %548 = vmatpush1.msra.mxu0 %v155
    %549 = vmatprep.subr.mxu0 %v342
    %550 = vmatpush2.msra.mxu0 %v341
    %551 = vmatprep.subr.mxu0 %v336
    %552 = vmatpush2.msra.mxu0 %v335
    %553 = vmatprep.subr.mxu0 %v330
    %554 = vmatpush2.msra.mxu0 %v329
    %555 = vmatprep.subr.mxu0 %v324
    %556 = vmatpush2.msra.mxu0 %v323
    %557 = vmatprep.subr.mxu0 %v318
    %558 = vmatpush2.msra.mxu0 %v317
    %559 = vmatprep.subr.mxu0 %v312
    %560 = vmatpush2.msra.mxu0 %v311
    %561 = vmatprep.subr.mxu0 %v306
    %562 = vmatpush2.msra.mxu0 %v305
    %563 = vmatprep.subr.mxu0 %v300
    %564 = vmatpush2.msra.mxu0 %v299
    %565 = vmatprep.subr.mxu0 %v294
    %566 = vmatpush2.msra.mxu0 %v293
    %567 = vmatprep.subr.mxu0 %v288
    %568 = vmatpush2.msra.mxu0 %v287
    %569 = vmatprep.subr.mxu0 %v282
    %570 = vmatpush2.msra.mxu0 %v281
    %571 = vmatprep.subr.mxu0 %v276
    %572 = vmatpush2.msra.mxu0 %v275
    %573 = vmatprep.subr.mxu0 %v270
    %574 = vmatpush2.msra.mxu0 %v269
    %575 = vmatprep.subr.mxu0 %v264
    %576 = vmatpush2.msra.mxu0 %v263
    %577 = vmatprep.subr.mxu0 %v258
    %578 = vmatpush2.msra.mxu0 %v257
    %579 = vmatprep.subr.mxu0 %v252
    %580 = vmatpush2.msra.mxu0 %v251
    %581 = vmatprep.mubr.f32.mxu0 %v150
    %582 = vmatmul.mubr.f32.gmra.mxu0 %v149
    %v583 = vpop.f32.mrf.mxu0
    %v584 = vadd.f32 %v364, %v583
    %v585 = vpop.f32.mrf.mxu0
    %v586 = vadd.f32 %v368, %v585
    %587 = vdwg.mxu0
    %v594 = vcombine.low %v442, %v444
    %v595 = vcombine.high %v442, %v444
    %v596 = vcombine.low %v513, %v515
    %v597 = vcombine.high %v513, %v515
    %v599 = vunpack.c.l.s4 1983009808
    %v600 = vunpack.c.0.s8 %v599
    %v601 = vlaneseq
    %v602 = vshrl.u32 %v601, 7
    %v603 = vsub.s32 %v600, %v602
    %v604 = vrot.slane %v594, %v603
    %v606 = vunpack.c.l.s4 1983009808
    %v607 = vunpack.c.0.s8 %v606
    %v608 = vlaneseq
    %v609 = vshrl.u32 %v608, 7
    %v610 = vsub.s32 %v607, %v609
    %v611 = vrot.slane %v595, %v610
    %v613 = vunpack.c.l.s4 1983009808
    %v614 = vunpack.c.0.s8 %v613
    %v615 = vlaneseq
    %v616 = vshrl.u32 %v615, 7
    %v617 = vsub.s32 %v614, %v616
    %v618 = vrot.slane %v596, %v617
    %v620 = vunpack.c.l.s4 1983009808
    %v621 = vunpack.c.0.s8 %v620
    %v622 = vlaneseq
    %v623 = vshrl.u32 %v622, 7
    %v624 = vsub.s32 %v621, %v623
    %v625 = vrot.slane %v597, %v624
    %v626 = vcombine.low %v604, %v618
    %v627 = vcombine.high %v604, %v618
    %v628 = vcombine.low %v611, %v625
    %v629 = vcombine.high %v611, %v625
    %v630 = vcombine.low %v584, %v586
    %v631 = vcombine.high %v584, %v586
    %v633 = vunpack.c.l.s4 1983009808
    %v634 = vunpack.c.0.s8 %v633
    %v635 = vlaneseq
    %v636 = vshrl.u32 %v635, 7
    %v637 = vsub.s32 %v634, %v636
    %v638 = vrot.slane %v630, %v637
    %v640 = vunpack.c.l.s4 1983009808
    %v641 = vunpack.c.0.s8 %v640
    %v642 = vlaneseq
    %v643 = vshrl.u32 %v642, 7
    %v644 = vsub.s32 %v641, %v643
    %v645 = vrot.slane %v631, %v644
    %v646 = vcombine.high %v638, %v638
    %v647 = vcombine.high %v645, %v645
    %656 = vst [vmem:[#allocation2] sm:$0xff] %v626
    %vm657 = vcmask 1041408
    %vm658 = vcmask 486402
    %vm659 = vmor %vm658, %vm657
    %660 = vst.msk [vmem:[#allocation2 + $0x8] sm:$0xf] %vm659, %v638
    %661 = vst [vmem:[#allocation2 + $0xc] sm:$0xff] %v627
    %662 = vst.msk [vmem:[#allocation2 + $0x14] sm:$0xf] %vm659, %v646
    %663 = vst [vmem:[#allocation2 + $0x18] sm:$0xff] %v628
    %664 = vst.msk [vmem:[#allocation2 + $0x20] sm:$0xf] %vm659, %v645
    %665 = vst [vmem:[#allocation2 + $0x24] sm:$0xff] %v629
    %666 = vst.msk [vmem:[#allocation2 + $0x2c] sm:$0xf] %vm659, %v647
    // Predicated region
    $region22: #{policy_head_forward.1} parent=1 // pred_check
      _
    $region23: #{policy_head_forward.1} parent=1 // pred_check_branch
      %668 = sbr.rel (0) target = $region25
    $region24: #{policy_head_forward.1} parent=1 // pred_region
      %s670 = ssub.s32 768, 192
      %671 = vsyncadd [#allocation3], %s670
      %s672 = sshll.u32 [#allocation2], 4
      %s673 = int_to_ptr.vmem [resolvable:$true] %s672
      %678 = dma.vmem_to_hbm [thread:$0]  %s673, 192, %s5, [#allocation3], 192, 192, 12
    $region25: #{policy_head_forward.1} parent=1 // pred_fallthru
      _
    // Predicated region
    $region26: #{policy_head_forward.1} parent=1 // pred_check
      _
    $region27: #{policy_head_forward.1} parent=1 // pred_check_branch
      %680 = sbr.rel (0) target = $region29
    $region28: #{policy_head_forward.1} parent=1 // pred_region
      %681 = dma.done [#allocation3], 768
    $region29: #{policy_head_forward.1} parent=1 // pred_fallthru
      _
    %682 = vsyncpa [#allocation3], 1

</llo_original>
